<compile_context>
chip_gen: v5e
topology: v5e:2x2
jax: 0.10.0
libtpu: 0.0.40
codegen_flags: <defaults>
</compile_context>

<pallas_src>
import functools

import jax
import jax.numpy as jnp
from jax.experimental import pallas as pl
from jax.experimental.pallas import tpu as pltpu


# ----------------------------------------------------------------------------
# Fused kernel: im2col-conv + ReLU + global-avg-pool + fused attention(V only)
#               + block-diagonal multi-task classifier.
# ----------------------------------------------------------------------------
def fused_forward_kernel(p_ref, wconv_ref, bconv_ref, wv_ref, wc_ref, bc_ref,
                         o_ref, *, HW, E):
    TB = p_ref.shape[0]
    K = p_ref.shape[2]
    patches = p_ref[...].reshape(TB * HW, K)                    # (TB*HW, K)

    # Conv2d(3x3, pad=1) as a single im2col matmul, + bias + ReLU.
    conv = jnp.dot(patches, wconv_ref[...],
                   preferred_element_type=jnp.float32) + bconv_ref[...]
    conv = jnp.maximum(conv, 0.0)                               # (TB*HW, E)

    # AdaptiveAvgPool2d((1,1)) + Flatten -> per-image feature vector.
    feats = jnp.mean(conv.reshape(TB, HW, E), axis=1)           # (TB, E)

    # SingleHeadAttention with seq_len == 1: softmax over a length-1 axis is
    # exactly 1.0, so the attention output equals V = feats @ Wv^T.  The q/k
    # projections, scaled scores, exp and normalization are provably dead.
    v_all = jnp.dot(feats, wv_ref[...],
                    preferred_element_type=jnp.float32)         # (TB, T*E)

    # All task classifiers in one block-diagonal matmul (+ packed biases).
    logits = jnp.dot(v_all, wc_ref[...],
                     preferred_element_type=jnp.float32) + bc_ref[...]
    o_ref[...] = logits.reshape(TB, 1, -1)                      # (TB, 1, Cpad)


def fused_forward(patches, wconv, bconv, wv_all, wc_bd, bc_all, *, embed_dim):
    B, HW, K = patches.shape
    E = embed_dim
    TE = wv_all.shape[1]
    Cpad = wc_bd.shape[1]

    # >=2 parallel batch blocks when possible (uses both v7x TensorCores);
    # otherwise a single block covering the whole batch.
    nblk = 2 if (B >= 2 and B % 2 == 0) else 1
    TB = B // nblk

    kern = functools.partial(fused_forward_kernel, HW=HW, E=E)
    out = pl.pallas_call(
        kern,
        out_shape=jax.ShapeDtypeStruct((B, 1, Cpad), jnp.float32),
        grid=(nblk,),
        in_specs=[
            pl.BlockSpec((TB, HW, K), lambda b: (b, 0, 0)),
            pl.BlockSpec((K, E), lambda b: (0, 0)),
            pl.BlockSpec((1, E), lambda b: (0, 0)),
            pl.BlockSpec((E, TE), lambda b: (0, 0)),
            pl.BlockSpec((TE, Cpad), lambda b: (0, 0)),
            pl.BlockSpec((1, Cpad), lambda b: (0, 0)),
        ],
        out_specs=pl.BlockSpec((TB, 1, Cpad), lambda b: (b, 0, 0)),
        compiler_params=pltpu.CompilerParams(
            dimension_semantics=("parallel",)),
    )(patches, wconv, bconv, wv_all, wc_bd, bc_all)
    return out.reshape(B, Cpad)


# ----------------------------------------------------------------------------
# Wrapper-side im2col (single fused XLA pass over the small activation).
# ----------------------------------------------------------------------------
def _im2col_nhwc(x_nhwc, KH, KW):
    B, H, W, C = x_nhwc.shape
    ph, pw = KH // 2, KW // 2
    xp = jnp.pad(x_nhwc, ((0, 0), (ph, ph), (pw, pw), (0, 0)))
    cols = [xp[:, kh:kh + H, kw:kw + W, :]
            for kh in range(KH) for kw in range(KW)]
    patches = jnp.concatenate(cols, axis=-1)        # (B, H, W, KH*KW*C)
    return patches.reshape(B, H * W, KH * KW * C)


# ----------------------------------------------------------------------------
# Model wrapper (all weight packing hoisted to __init__).
# ----------------------------------------------------------------------------
class MultiHeadAttentionPerTaskModel:
    def __init__(self, tasks, key, in_channels=3, num_features=32):
        self.tasks = tasks
        self.num_features = num_features
        E = num_features
        KH = KW = 3
        keys = jax.random.split(key, 2 + 5 * len(tasks))

        # Synthetic truncated encoder: Conv2d(in_channels -> E, 3x3, pad=1)+ReLU.
        # TODO(synk): the original module truncates an arbitrary base_encoder;
        # no backbone is provided, so a Conv3x3+ReLU stem stands in for it.
        conv_w = 0.1 * jax.random.normal(
            keys[0], (KH, KW, in_channels, E), jnp.float32)
        conv_b = 0.1 * jax.random.normal(keys[1], (E,), jnp.float32)

        # Per-task parameters (PyTorch Linear layout: (out, in)).
        self.params = {}
        task_classes = {}
        ki = 2
        for task_name, value in tasks.items():
            num_classes = len(value) if isinstance(value, list) else value
            task_classes[task_name] = num_classes
            self.params[task_name] = {
                # wq / wk are part of the module but provably never affect the
                # output for seq_len == 1 (softmax over length-1 axis == 1).
                "wq": 0.1 * jax.random.normal(keys[ki + 0], (E, E), jnp.float32),
                "wk": 0.1 * jax.random.normal(keys[ki + 1], (E, E), jnp.float32),
                "wv": 0.1 * jax.random.normal(keys[ki + 2], (E, E), jnp.float32),
                "wc": 0.1 * jax.random.normal(keys[ki + 3],
                                              (num_classes, E), jnp.float32),
                "bc": 0.1 * jax.random.normal(keys[ki + 4],
                                              (num_classes,), jnp.float32),
            }
            ki += 5

        # ---- One-time packing for the fused kernel (no per-call transposes).
        self._KH, self._KW = KH, KW
        self._wconv = conv_w.reshape(KH * KW * in_channels, E)   # (27, E)
        self._bconv = conv_b.reshape(1, E)

        T = len(tasks)
        sum_C = sum(task_classes.values())
        Cpad = ((sum_C + 127) // 128) * 128                      # lane-dense out
        wv_cols, offsets = [], {}
        wc_bd = jnp.zeros((T * E, Cpad), jnp.float32)
        bc_all = jnp.zeros((1, Cpad), jnp.float32)
        off = 0
        for t, task_name in enumerate(tasks):
            p = self.params[task_name]
            C = task_classes[task_name]
            wv_cols.append(p["wv"].T)                            # (E, E)
            wc_bd = wc_bd.at[t * E:(t + 1) * E, off:off + C].set(p["wc"].T)
            bc_all = bc_all.at[0, off:off + C].set(p["bc"])
            offsets[task_name] = (off, C)
            off += C
        self._wv_all = jnp.concatenate(wv_cols, axis=1)          # (E, T*E)
        self._wc_bd = wc_bd                                      # (T*E, Cpad)
        self._bc_all = bc_all                                    # (1, Cpad)
        self._task_slices = offsets

    def __call__(self, x_nchw):
        # PyTorch convention is NCHW; kernel wants NHWC im2col patches.
        x = jnp.transpose(x_nchw, (0, 2, 3, 1)).astype(jnp.float32)
        patches = _im2col_nhwc(x, self._KH, self._KW)            # (B, H*W, 27)
        out_all = fused_forward(patches, self._wconv, self._bconv,
                                self._wv_all, self._wc_bd, self._bc_all,
                                embed_dim=self.num_features)     # (B, Cpad)
        outputs = {}
        for task_name, (off, C) in self._task_slices.items():
            outputs[task_name] = out_all[:, off:off + C]
        return outputs


if __name__ == "__main__":
    key = jax.random.PRNGKey(0)
    k_model, k_x = jax.random.split(key)
    tasks = {"task a": 3, "task b": ["u", "v", "w", "x", "y"]}
    model = MultiHeadAttentionPerTaskModel(tasks, k_model,
                                           in_channels=3, num_features=32)
    x = jax.random.normal(k_x, (2, 3, 16, 16), jnp.float32)   # NCHW like torch
    outs = model(x)
    outs = jax.block_until_ready(outs)
    assert outs["task a"].shape == (2, 3)
    assert outs["task b"].shape == (2, 5)
    assert all(bool(jnp.all(jnp.isfinite(v))) for v in outs.values())
    print("KERNEL_OK")
</pallas_src>

<mosaic_0001>
module attributes {stable_mosaic.version = 11 : i64} {
  func.func @fused_forward_kernel(%arg0: i32, %arg1: memref<1x256x27xf32, #tpu.memory_space<vmem>>, %arg2: memref<27x32xf32, #tpu.memory_space<vmem>>, %arg3: memref<1x32xf32, #tpu.memory_space<vmem>>, %arg4: memref<32x64xf32, #tpu.memory_space<vmem>>, %arg5: memref<64x128xf32, #tpu.memory_space<vmem>>, %arg6: memref<1x128xf32, #tpu.memory_space<vmem>>, %arg7: memref<1x1x128xf32, #tpu.memory_space<vmem>>) attributes {dimension_semantics = [#tpu.dimension_semantics<parallel>], iteration_bounds = array<i64: 2>, scalar_prefetch = 0 : i64, scratch_operands = 0 : i64, tpu.core_type = #tpu.core_type<tc>, window_params = [{transform_indices = @transform_0, window_bounds = array<i64: 1, 256, 27>}, {pipeline_mode = #tpu.pipeline_mode<synchronous>, transform_indices = @transform_1, window_bounds = array<i64: 27, 32>}, {pipeline_mode = #tpu.pipeline_mode<synchronous>, transform_indices = @transform_2, window_bounds = array<i64: 1, 32>}, {pipeline_mode = #tpu.pipeline_mode<synchronous>, transform_indices = @transform_3, window_bounds = array<i64: 32, 64>}, {pipeline_mode = #tpu.pipeline_mode<synchronous>, transform_indices = @transform_4, window_bounds = array<i64: 64, 128>}, {pipeline_mode = #tpu.pipeline_mode<synchronous>, transform_indices = @transform_5, window_bounds = array<i64: 1, 128>}, {transform_indices = @transform_6, window_bounds = array<i64: 1, 1, 128>}]} {
    %c0 = arith.constant 0 : index
    %c0_0 = arith.constant 0 : index
    %c0_1 = arith.constant 0 : index
    %0 = vector.load %arg1[%c0, %c0_0, %c0_1] : memref<1x256x27xf32, #tpu.memory_space<vmem>>, vector<1x256x27xf32>
    %1 = vector.shape_cast %0 : vector<1x256x27xf32> to vector<256x27xf32>
    %c0_2 = arith.constant 0 : index
    %c0_3 = arith.constant 0 : index
    %2 = vector.load %arg2[%c0_2, %c0_3] : memref<27x32xf32, #tpu.memory_space<vmem>>, vector<27x32xf32>
    %cst = arith.constant dense<0.000000e+00> : vector<256x32xf32>
    %3 = tpu.matmul %1, %2, %cst {dimension_numbers = #tpu.dot_dimension_numbers<[1], [0], [0], [1], [0, 0, 1, 1], [], []>} : vector<256x27xf32>, vector<27x32xf32>, vector<256x32xf32> -> vector<256x32xf32>
    %c0_4 = arith.constant 0 : index
    %c0_5 = arith.constant 0 : index
    %4 = vector.load %arg3[%c0_4, %c0_5] : memref<1x32xf32, #tpu.memory_space<vmem>>, vector<1x32xf32>
    %5 = vector.broadcast %4 : vector<1x32xf32> to vector<256x32xf32>
    %6 = arith.addf %3, %5 : vector<256x32xf32>
    %cst_6 = arith.constant 0.000000e+00 : f32
    %7 = vector.broadcast %cst_6 : f32 to vector<256x32xf32>
    %8 = arith.maximumf %6, %7 : vector<256x32xf32>
    %9 = vector.shape_cast %8 : vector<256x32xf32> to vector<1x256x32xf32>
    %cst_7 = arith.constant dense<0.000000e+00> : vector<1x32xf32>
    %10 = vector.multi_reduction <add>, %9, %cst_7 [1] : vector<1x256x32xf32> to vector<1x32xf32>
    %cst_8 = arith.constant 2.560000e+02 : f32
    %11 = vector.broadcast %cst_8 : f32 to vector<1x32xf32>
    %12 = arith.divf %10, %11 : vector<1x32xf32>
    %c0_9 = arith.constant 0 : index
    %c0_10 = arith.constant 0 : index
    %13 = vector.load %arg4[%c0_9, %c0_10] : memref<32x64xf32, #tpu.memory_space<vmem>>, vector<32x64xf32>
    %cst_11 = arith.constant dense<0.000000e+00> : vector<1x64xf32>
    %14 = tpu.matmul %12, %13, %cst_11 {dimension_numbers = #tpu.dot_dimension_numbers<[1], [0], [0], [1], [0, 0, 1, 1], [], []>} : vector<1x32xf32>, vector<32x64xf32>, vector<1x64xf32> -> vector<1x64xf32>
    %c0_12 = arith.constant 0 : index
    %c0_13 = arith.constant 0 : index
    %15 = vector.load %arg5[%c0_12, %c0_13] : memref<64x128xf32, #tpu.memory_space<vmem>>, vector<64x128xf32>
    %cst_14 = arith.constant dense<0.000000e+00> : vector<1x128xf32>
    %16 = tpu.matmul %14, %15, %cst_14 {dimension_numbers = #tpu.dot_dimension_numbers<[1], [0], [0], [1], [0, 0, 1, 1], [], []>} : vector<1x64xf32>, vector<64x128xf32>, vector<1x128xf32> -> vector<1x128xf32>
    %c0_15 = arith.constant 0 : index
    %c0_16 = arith.constant 0 : index
    %17 = vector.load %arg6[%c0_15, %c0_16] : memref<1x128xf32, #tpu.memory_space<vmem>>, vector<1x128xf32>
    %18 = arith.addf %16, %17 : vector<1x128xf32>
    %19 = vector.shape_cast %18 : vector<1x128xf32> to vector<1x1x128xf32>
    %c0_17 = arith.constant 0 : index
    %c0_18 = arith.constant 0 : index
    %c0_19 = arith.constant 0 : index
    %20 = vector.load %arg7[%c0_17, %c0_18, %c0_19] : memref<1x1x128xf32, #tpu.memory_space<vmem>>, vector<1x1x128xf32>
    tpu.vector_store %arg7[%c0_17, %c0_18, %c0_19], %19 {strides = array<i32>} : memref<1x1x128xf32, #tpu.memory_space<vmem>>, vector<1x1x128xf32>,
    return
  }
  func.func @transform_0(%arg0: i32) -> (i32, i32, i32) {
    %c0_i32 = arith.constant 0 : i32
    %c0_i32_0 = arith.constant 0 : i32
    %c0_i32_1 = arith.constant 0 : i32
    return %arg0, %c0_i32, %c0_i32_0 : i32, i32, i32
  }
  func.func @transform_1(%arg0: i32) -> (i32, i32) {
    %c0_i32 = arith.constant 0 : i32
    %c0_i32_0 = arith.constant 0 : i32
    %c0_i32_1 = arith.constant 0 : i32
    return %c0_i32, %c0_i32_0 : i32, i32
  }
  func.func @transform_2(%arg0: i32) -> (i32, i32) {
    %c0_i32 = arith.constant 0 : i32
    %c0_i32_0 = arith.constant 0 : i32
    %c0_i32_1 = arith.constant 0 : i32
    return %c0_i32, %c0_i32_0 : i32, i32
  }
  func.func @transform_3(%arg0: i32) -> (i32, i32) {
    %c0_i32 = arith.constant 0 : i32
    %c0_i32_0 = arith.constant 0 : i32
    %c0_i32_1 = arith.constant 0 : i32
    return %c0_i32, %c0_i32_0 : i32, i32
  }
  func.func @transform_4(%arg0: i32) -> (i32, i32) {
    %c0_i32 = arith.constant 0 : i32
    %c0_i32_0 = arith.constant 0 : i32
    %c0_i32_1 = arith.constant 0 : i32
    return %c0_i32, %c0_i32_0 : i32, i32
  }
  func.func @transform_5(%arg0: i32) -> (i32, i32) {
    %c0_i32 = arith.constant 0 : i32
    %c0_i32_0 = arith.constant 0 : i32
    %c0_i32_1 = arith.constant 0 : i32
    return %c0_i32, %c0_i32_0 : i32, i32
  }
  func.func @transform_6(%arg0: i32) -> (i32, i32, i32) {
    %c0_i32 = arith.constant 0 : i32
    %c0_i32_0 = arith.constant 0 : i32
    %c0_i32_1 = arith.constant 0 : i32
    return %arg0, %c0_i32, %c0_i32_0 : i32, i32, i32
  }
}

</mosaic_0001>

<llo_original>
// kernel: tpu_custom_call.1
$region0: #{tpu_custom_call.1}
  #allocation0 [shape = 'u32[]', space=smem, size = 0x4, offset = 0x4, fixed_abs, tag = 'smem constant byte address 0x4 - core index']
  #allocation1 [shape = 'u32[72,128]{1,0:T(1,128)}', space=vmem, size = 0x9000, scoped, tag = 'internal scratch']
  %s0 = inlined_call_operand.vmem [shape: f32[2,256,27], index: 0, kind: input, shape index: {}]
  %s1 = inlined_call_operand.vmem [shape: f32[27,32], index: 1, kind: input, shape index: {}]
  %s2 = inlined_call_operand.vmem [shape: f32[1,32], index: 2, kind: input, shape index: {}]
  %s3 = inlined_call_operand.vmem [shape: f32[32,64], index: 3, kind: input, shape index: {}]
  %s4 = inlined_call_operand.vmem [shape: f32[64,128], index: 4, kind: input, shape index: {}]
  %s5 = inlined_call_operand.vmem [shape: f32[1,128], index: 5, kind: input, shape index: {}]
  %s6 = inlined_call_operand.hbm [shape: f32[2,1,128], index: 6, kind: output, shape index: {}]
  %s7 = sld [smem:[#allocation0]]
  $region57: #{tpu_custom_call.1} parent=0
    _
  %s9 = ssub.s32 1, %s7
  %s10 = scalar_select 0, %s9, %s7
  $region1: #{tpu_custom_call.1} parent=0
    #allocation2 [shape = 'u8[1024]{0}', space=vmem, size = 0x400, scoped, tag = 'output window, operand 0']
    #allocation3 [shape = 's32[2]{0}', space=sflag, size = 0x8, scoped, tag = 'scoped memory for tpu_custom_call.1']
    %11 = vsyncpa [#allocation3], 0
    %s12 = scalar_lea.sflag [#allocation3], 1
    %13 = vsyncpa %s12, 0
    loop: start=0, step=1, limit=4
    $region2: #{tpu_custom_call.1} parent=1 // loop_pre_header
      _
    $region3: #{tpu_custom_call.1} parent=1 // loop_header
      %s15 = sphi 0, %s19
      %p16 = scmp.ge.s32.totalorder %s15, 4
      %s25 = sphi 0, %s27
      %s28 = sphi 0, %s25
      %s29 = sphi 0, %s28
      %s45 = sphi 0, %s29
      %s49 = sphi 0, %s49
      %s51 = sphi 0, %s49
      %s52 = sphi 0, %s51
      %s66 = sphi 0, %s52
      %s70 = sphi 0, %s70
      %s72 = sphi 0, %s70
      %s73 = sphi 0, %s72
      %s87 = sphi 0, %s73
      %s91 = sphi 0, %s91
      %s93 = sphi 0, %s91
      %s94 = sphi 0, %s93
      %s108 = sphi 0, %s94
      %s112 = sphi 0, %s112
      %s114 = sphi 0, %s112
      %s115 = sphi 0, %s114
      %s129 = sphi 0, %s115
      %s133 = sphi 0, %s133
      %s135 = sphi 0, %s133
      %s136 = sphi 0, %s135
      %s150 = sphi 0, %s136
      %s156 = sphi 0, %s158
      %s159 = sphi 0, %s156
      %s160 = sphi 0, %s159
      %s176 = sphi 0, %s160
    $region4: #{tpu_custom_call.1} parent=1 // loop_header_branch
      %18 = sbr.rel (%p16) target = $region8
    $region5: #{tpu_custom_call.1} parent=1 // loop_body
      %s20 = ssub.s32 %s15, 1
      %s21 = ssub.s32 %s15, 2
      %s22 = sadd.s32 %s15, 1
      %s23 = ssub.s32 %s15, %s22
      %p24 = scmp.eq.s32.totalorder %s23, 0
      %s26 = sadd.s32 %s25, 1
      %s27 = scalar_select %p24, %s25, %s26
      %p30 = pneg %p24
      %p31 = scmp.eq.s32.totalorder %s15, 1
      %p32 = por %p30, %p31
      %p33 = scmp.ne.s32.totalorder %s25, %s28
      %p34 = scmp.eq.s32.totalorder %s15, 0
      %p35 = por %p33, %p34
      %p36 = scmp.ne.s32.totalorder %s25, %s28
      %p37 = scmp.eq.s32.totalorder %s20, 1
      %p38 = por %p36, %p37
      %p39 = scmp.ne.s32.totalorder %s28, %s29
      %p40 = scmp.eq.s32.totalorder %s20, 0
      %p41 = por %p39, %p40
      %p42 = scmp.ne.s32.totalorder %s28, %s29
      %p43 = scmp.eq.s32.totalorder %s21, 1
      %p44 = por %p42, %p43
      %p46 = scmp.ne.s32.totalorder %s29, %s45
      %p47 = scmp.eq.s32.totalorder %s21, 0
      %p48 = por %p46, %p47
      %s50 = sadd.s32 %s49, 1
      %p53 = scmp.eq.s32.totalorder %s15, 1
      %p54 = scmp.ne.s32.totalorder %s49, %s51
      %p55 = scmp.eq.s32.totalorder %s15, 0
      %p56 = por %p54, %p55
      %p57 = scmp.ne.s32.totalorder %s49, %s51
      %p58 = scmp.eq.s32.totalorder %s20, 1
      %p59 = por %p57, %p58
      %p60 = scmp.ne.s32.totalorder %s51, %s52
      %p61 = scmp.eq.s32.totalorder %s20, 0
      %p62 = por %p60, %p61
      %p63 = scmp.ne.s32.totalorder %s51, %s52
      %p64 = scmp.eq.s32.totalorder %s21, 1
      %p65 = por %p63, %p64
      %p67 = scmp.ne.s32.totalorder %s52, %s66
      %p68 = scmp.eq.s32.totalorder %s21, 0
      %p69 = por %p67, %p68
      %s71 = sadd.s32 %s70, 1
      %p74 = scmp.eq.s32.totalorder %s15, 1
      %p75 = scmp.ne.s32.totalorder %s70, %s72
      %p76 = scmp.eq.s32.totalorder %s15, 0
      %p77 = por %p75, %p76
      %p78 = scmp.ne.s32.totalorder %s70, %s72
      %p79 = scmp.eq.s32.totalorder %s20, 1
      %p80 = por %p78, %p79
      %p81 = scmp.ne.s32.totalorder %s72, %s73
      %p82 = scmp.eq.s32.totalorder %s20, 0
      %p83 = por %p81, %p82
      %p84 = scmp.ne.s32.totalorder %s72, %s73
      %p85 = scmp.eq.s32.totalorder %s21, 1
      %p86 = por %p84, %p85
      %p88 = scmp.ne.s32.totalorder %s73, %s87
      %p89 = scmp.eq.s32.totalorder %s21, 0
      %p90 = por %p88, %p89
      %s92 = sadd.s32 %s91, 1
      %p95 = scmp.eq.s32.totalorder %s15, 1
      %p96 = scmp.ne.s32.totalorder %s91, %s93
      %p97 = scmp.eq.s32.totalorder %s15, 0
      %p98 = por %p96, %p97
      %p99 = scmp.ne.s32.totalorder %s91, %s93
      %p100 = scmp.eq.s32.totalorder %s20, 1
      %p101 = por %p99, %p100
      %p102 = scmp.ne.s32.totalorder %s93, %s94
      %p103 = scmp.eq.s32.totalorder %s20, 0
      %p104 = por %p102, %p103
      %p105 = scmp.ne.s32.totalorder %s93, %s94
      %p106 = scmp.eq.s32.totalorder %s21, 1
      %p107 = por %p105, %p106
      %p109 = scmp.ne.s32.totalorder %s94, %s108
      %p110 = scmp.eq.s32.totalorder %s21, 0
      %p111 = por %p109, %p110
      %s113 = sadd.s32 %s112, 1
      %p116 = scmp.eq.s32.totalorder %s15, 1
      %p117 = scmp.ne.s32.totalorder %s112, %s114
      %p118 = scmp.eq.s32.totalorder %s15, 0
      %p119 = por %p117, %p118
      %p120 = scmp.ne.s32.totalorder %s112, %s114
      %p121 = scmp.eq.s32.totalorder %s20, 1
      %p122 = por %p120, %p121
      %p123 = scmp.ne.s32.totalorder %s114, %s115
      %p124 = scmp.eq.s32.totalorder %s20, 0
      %p125 = por %p123, %p124
      %p126 = scmp.ne.s32.totalorder %s114, %s115
      %p127 = scmp.eq.s32.totalorder %s21, 1
      %p128 = por %p126, %p127
      %p130 = scmp.ne.s32.totalorder %s115, %s129
      %p131 = scmp.eq.s32.totalorder %s21, 0
      %p132 = por %p130, %p131
      %s134 = sadd.s32 %s133, 1
      %p137 = scmp.eq.s32.totalorder %s15, 1
      %p138 = scmp.ne.s32.totalorder %s133, %s135
      %p139 = scmp.eq.s32.totalorder %s15, 0
      %p140 = por %p138, %p139
      %p141 = scmp.ne.s32.totalorder %s133, %s135
      %p142 = scmp.eq.s32.totalorder %s20, 1
      %p143 = por %p141, %p142
      %p144 = scmp.ne.s32.totalorder %s135, %s136
      %p145 = scmp.eq.s32.totalorder %s20, 0
      %p146 = por %p144, %p145
      %p147 = scmp.ne.s32.totalorder %s135, %s136
      %p148 = scmp.eq.s32.totalorder %s21, 1
      %p149 = por %p147, %p148
      %p151 = scmp.ne.s32.totalorder %s136, %s150
      %p152 = scmp.eq.s32.totalorder %s21, 0
      %p153 = por %p151, %p152
      %s154 = ssub.s32 %s15, %s22
      %p155 = scmp.eq.s32.totalorder %s154, 0
      %s157 = sadd.s32 %s156, 1
      %s158 = scalar_select %p155, %s156, %s157
      %p161 = pneg %p155
      %p162 = scmp.eq.s32.totalorder %s15, 1
      %p163 = por %p161, %p162
      %p164 = scmp.ne.s32.totalorder %s156, %s159
      %p165 = scmp.eq.s32.totalorder %s15, 0
      %p166 = por %p164, %p165
      %p167 = scmp.ne.s32.totalorder %s156, %s159
      %p168 = scmp.eq.s32.totalorder %s20, 1
      %p169 = por %p167, %p168
      %p170 = scmp.ne.s32.totalorder %s159, %s160
      %p171 = scmp.eq.s32.totalorder %s20, 0
      %p172 = por %p170, %p171
      %p173 = scmp.ne.s32.totalorder %s159, %s160
      %p174 = scmp.eq.s32.totalorder %s21, 1
      %p175 = por %p173, %p174
      %p177 = scmp.ne.s32.totalorder %s160, %s176
      %p178 = scmp.eq.s32.totalorder %s21, 0
      %p179 = por %p177, %p178
      %p180 = scmp.le.s32.totalorder 1, %s15
      %p181 = scmp.lt.s32.totalorder %s15, 3
      %p182 = pnand %p180, %p181
      %p183 = pneg %p182
      // Predicated region
      $region9: #{tpu_custom_call.1} parent=5 // pred_check
        _
      $region10: #{tpu_custom_call.1} parent=5 // pred_check_branch
        %185 = sbr.rel (%p182) target = $region12
      $region11: #{tpu_custom_call.1} parent=5 // pred_region
        %s186 = ssub.s32 %s15, 1
        // Predicated region
        $region13: #{tpu_custom_call.1} parent=11 // pred_check
          %p187 = pneg %p62
        $region14: #{tpu_custom_call.1} parent=11 // pred_check_branch
          %189 = sbr.rel (%p187) target = $region16
        $region15: #{tpu_custom_call.1} parent=11 // pred_region
          _
        $region16: #{tpu_custom_call.1} parent=11 // pred_fallthru
          _
        // Predicated region
        $region17: #{tpu_custom_call.1} parent=11 // pred_check
          %p190 = pneg %p83
        $region18: #{tpu_custom_call.1} parent=11 // pred_check_branch
          %192 = sbr.rel (%p190) target = $region20
        $region19: #{tpu_custom_call.1} parent=11 // pred_region
          _
        $region20: #{tpu_custom_call.1} parent=11 // pred_fallthru
          _
        // Predicated region
        $region21: #{tpu_custom_call.1} parent=11 // pred_check
          %p193 = pneg %p104
        $region22: #{tpu_custom_call.1} parent=11 // pred_check_branch
          %195 = sbr.rel (%p193) target = $region24
        $region23: #{tpu_custom_call.1} parent=11 // pred_region
          _
        $region24: #{tpu_custom_call.1} parent=11 // pred_fallthru
          _
        // Predicated region
        $region25: #{tpu_custom_call.1} parent=11 // pred_check
          %p196 = pneg %p125
        $region26: #{tpu_custom_call.1} parent=11 // pred_check_branch
          %198 = sbr.rel (%p196) target = $region28
        $region27: #{tpu_custom_call.1} parent=11 // pred_region
          _
        $region28: #{tpu_custom_call.1} parent=11 // pred_fallthru
          _
        // Predicated region
        $region29: #{tpu_custom_call.1} parent=11 // pred_check
          %p199 = pneg %p146
        $region30: #{tpu_custom_call.1} parent=11 // pred_check_branch
          %201 = sbr.rel (%p199) target = $region32
        $region31: #{tpu_custom_call.1} parent=11 // pred_region
          _
        $region32: #{tpu_custom_call.1} parent=11 // pred_fallthru
          _
      $region12: #{tpu_custom_call.1} parent=5 // pred_fallthru
        _
      %p202 = scmp.lt.s32.totalorder %s15, 2
      // Predicated region
      $region33: #{tpu_custom_call.1} parent=5 // pred_check
        %p203 = pneg %p202
      $region34: #{tpu_custom_call.1} parent=5 // pred_check_branch
        %205 = sbr.rel (%p203) target = $region36
      $region35: #{tpu_custom_call.1} parent=5 // pred_region
        // Predicated region
        $region37: #{tpu_custom_call.1} parent=35 // pred_check
          %p206 = pneg %p35
        $region38: #{tpu_custom_call.1} parent=35 // pred_check_branch
          %208 = sbr.rel (%p206) target = $region40
        $region39: #{tpu_custom_call.1} parent=35 // pred_region
          %p209 = scmp.lt.s32.totalorder %s15, 1
          %s210 = scalar_select %p209, %s15, 1
          %s211 = smul.addr %s210, 32
          %s212 = smul.addr %s211, 8
          %s213 = scalar_lea.vmem %s0, %s212
        $region40: #{tpu_custom_call.1} parent=35 // pred_fallthru
          _
      $region36: #{tpu_custom_call.1} parent=5 // pred_fallthru
        _
      %p214 = scmp.le.s32.totalorder 1, %s15
      %p215 = scmp.lt.s32.totalorder %s15, 3
      %p216 = pnand %p214, %p215
      %p217 = pneg %p216
      // Predicated region
      $region41: #{tpu_custom_call.1} parent=5 // pred_check
        _
      $region42: #{tpu_custom_call.1} parent=5 // pred_check_branch
        %219 = sbr.rel (%p216) target = $region44
      $region43: #{tpu_custom_call.1} parent=5 // pred_region
        %s220 = ssub.s32 %s15, 1
        %p221 = scmp.lt.s32.totalorder %s20, 1
        %s222 = scalar_select %p221, %s20, 1
        %s223 = smul.addr %s222, 32
        %s224 = smul.addr %s223, 8
        %s225 = scalar_lea.vmem %s0, %s224
        %p226 = pneg %p41
        %p227 = pneg %p38
        %p228 = pneg %p62
        %p229 = pneg %p59
        %p230 = pneg %p83
        %p231 = pneg %p80
        %p232 = pneg %p104
        %p233 = pneg %p101
        %p234 = pneg %p125
        %p235 = pneg %p122
        %p236 = pneg %p146
        %p237 = pneg %p143
        %p238 = pneg %p172
        %p239 = pneg %p169
        %s240 = sand.u32 %s159, 1
        %s241 = scalar_lea.sflag [#allocation3], %s240
        %s242 = sand.u32 %s159, 1
        %s243 = scalar_lea.vmem [#allocation2], %s242
        %p244 = scmp.lt.s32.totalorder %s20, 1
        %s245 = scalar_select %p244, %s20, 1
        %s246 = smul.addr %s245, 32
        %s247 = smul.addr %s246, 8
        %s248 = scalar_lea.vmem %s0, %s247
        %v249 = vld [vmem:[%s248] sm:$0xff]
        %v250 = vld [vmem:[%s248 + $0x8] sm:$0xff]
        %v251 = vld [vmem:[%s248 + $0x10] sm:$0xff]
        %v252 = vld [vmem:[%s248 + $0x18] sm:$0xff]
        %v253 = vld [vmem:[%s248 + $0x20] sm:$0xff]
        %v254 = vld [vmem:[%s248 + $0x28] sm:$0xff]
        %v255 = vld [vmem:[%s248 + $0x30] sm:$0xff]
        %v256 = vld [vmem:[%s248 + $0x38] sm:$0xff]
        %v257 = vld [vmem:[%s248 + $0x40] sm:$0xff]
        %v258 = vld [vmem:[%s248 + $0x48] sm:$0xff]
        %v259 = vld [vmem:[%s248 + $0x50] sm:$0xff]
        %v260 = vld [vmem:[%s248 + $0x58] sm:$0xff]
        %v261 = vld [vmem:[%s248 + $0x60] sm:$0xff]
        %v262 = vld [vmem:[%s248 + $0x68] sm:$0xff]
        %v263 = vld [vmem:[%s248 + $0x70] sm:$0xff]
        %v264 = vld [vmem:[%s248 + $0x78] sm:$0xff]
        %v265 = vld [vmem:[%s248 + $0x80] sm:$0xff]
        %v266 = vld [vmem:[%s248 + $0x88] sm:$0xff]
        %v267 = vld [vmem:[%s248 + $0x90] sm:$0xff]
        %v268 = vld [vmem:[%s248 + $0x98] sm:$0xff]
        %v269 = vld [vmem:[%s248 + $0xa0] sm:$0xff]
        %v270 = vld [vmem:[%s248 + $0xa8] sm:$0xff]
        %v271 = vld [vmem:[%s248 + $0xb0] sm:$0xff]
        %v272 = vld [vmem:[%s248 + $0xb8] sm:$0xff]
        %v273 = vld [vmem:[%s248 + $0xc0] sm:$0xff]
        %v274 = vld [vmem:[%s248 + $0xc8] sm:$0xff]
        %v275 = vld [vmem:[%s248 + $0xd0] sm:$0xff]
        %v276 = vld [vmem:[%s248 + $0xd8] sm:$0xff]
        %v277 = vld [vmem:[%s248 + $0xe0] sm:$0xff]
        %v278 = vld [vmem:[%s248 + $0xe8] sm:$0xff]
        %v279 = vld [vmem:[%s248 + $0xf0] sm:$0xff]
        %v280 = vld [vmem:[%s248 + $0xf8] sm:$0xff]
        %v281 = vld [vmem:[%s1] sm:$0xff]
        %v282 = vld [vmem:[%s1 + $0x8] sm:$0xff]
        %v283 = vld [vmem:[%s1 + $0x10] sm:$0xff]
        %v284 = vld [vmem:[%s1 + $0x18] sm:$0x7]
        %v285 = vld [vmem:[%s2] sm:$0x1]
        %v287 = vperm.slane %v285, 0
        %vm289 = vcmask 220160
        %v291 = vsel %vm289, %v249, 0
        %v294 = vsel %vm289, %v250, 0
        %v297 = vsel %vm289, %v251, 0
        %v300 = vsel %vm289, %v252, 0
        %v303 = vsel %vm289, %v253, 0
        %v306 = vsel %vm289, %v254, 0
        %v309 = vsel %vm289, %v255, 0
        %v312 = vsel %vm289, %v256, 0
        %v315 = vsel %vm289, %v257, 0
        %v318 = vsel %vm289, %v258, 0
        %v321 = vsel %vm289, %v259, 0
        %v324 = vsel %vm289, %v260, 0
        %v327 = vsel %vm289, %v261, 0
        %v330 = vsel %vm289, %v262, 0
        %v333 = vsel %vm289, %v263, 0
        %v336 = vsel %vm289, %v264, 0
        %v339 = vsel %vm289, %v265, 0
        %v342 = vsel %vm289, %v266, 0
        %v345 = vsel %vm289, %v267, 0
        %v348 = vsel %vm289, %v268, 0
        %v351 = vsel %vm289, %v269, 0
        %v354 = vsel %vm289, %v270, 0
        %v357 = vsel %vm289, %v271, 0
        %v360 = vsel %vm289, %v272, 0
        %v363 = vsel %vm289, %v273, 0
        %v366 = vsel %vm289, %v274, 0
        %v369 = vsel %vm289, %v275, 0
        %v372 = vsel %vm289, %v276, 0
        %v375 = vsel %vm289, %v277, 0
        %v378 = vsel %vm289, %v278, 0
        %v381 = vsel %vm289, %v279, 0
        %v384 = vsel %vm289, %v280, 0
        %vm386 = vcmask 1042432
        %v388 = vsel %vm386, %v284, 0
        %390 = vmatpush.msra.mxu0 0.0
        %391 = vmatpush.msra.mxu0 0.0
        %392 = vmatpush.msra.mxu0 0.0
        %393 = vmatpush.msra.mxu0 0.0
        %394 = vmatpush.msra.mxu0 0.0
        %395 = vmatpush.msra.mxu0 0.0
        %396 = vmatpush.msra.mxu0 0.0
        %397 = vmatpush.msra.mxu0 0.0
        %398 = vmatpush.msra.mxu0 0.0
        %399 = vmatpush.msra.mxu0 0.0
        %400 = vmatpush.msra.mxu0 0.0
        %401 = vmatpush.msra.mxu0 0.0
        %402 = vmatpush.msra.mxu0 %v388
        %403 = vmatpush.msra.mxu0 %v283
        %404 = vmatpush.msra.mxu0 %v282
        %405 = vmatpush.msra.mxu0 %v281
        %406 = vmatmul.f32.gmra.mxu0 %v291
        %v407 = vpop.f32.mrf.mxu0
        %v408 = vadd.f32 %v287, %v407
        %409 = vmatmul.f32.gmra.mxu0 %v294
        %v410 = vpop.f32.mrf.mxu0
        %v411 = vadd.f32 %v287, %v410
        %412 = vmatmul.f32.gmra.mxu0 %v297
        %v413 = vpop.f32.mrf.mxu0
        %v414 = vadd.f32 %v287, %v413
        %415 = vmatmul.f32.gmra.mxu0 %v300
        %v416 = vpop.f32.mrf.mxu0
        %v417 = vadd.f32 %v287, %v416
        %418 = vmatmul.f32.gmra.mxu0 %v303
        %v419 = vpop.f32.mrf.mxu0
        %v420 = vadd.f32 %v287, %v419
        %421 = vmatmul.f32.gmra.mxu0 %v306
        %v422 = vpop.f32.mrf.mxu0
        %v423 = vadd.f32 %v287, %v422
        %424 = vmatmul.f32.gmra.mxu0 %v309
        %v425 = vpop.f32.mrf.mxu0
        %v426 = vadd.f32 %v287, %v425
        %427 = vmatmul.f32.gmra.mxu0 %v312
        %v428 = vpop.f32.mrf.mxu0
        %v429 = vadd.f32 %v287, %v428
        %430 = vmatmul.f32.gmra.mxu0 %v315
        %v431 = vpop.f32.mrf.mxu0
        %v432 = vadd.f32 %v287, %v431
        %433 = vmatmul.f32.gmra.mxu0 %v318
        %v434 = vpop.f32.mrf.mxu0
        %v435 = vadd.f32 %v287, %v434
        %436 = vmatmul.f32.gmra.mxu0 %v321
        %v437 = vpop.f32.mrf.mxu0
        %v438 = vadd.f32 %v287, %v437
        %439 = vmatmul.f32.gmra.mxu0 %v324
        %v440 = vpop.f32.mrf.mxu0
        %v441 = vadd.f32 %v287, %v440
        %442 = vmatmul.f32.gmra.mxu0 %v327
        %v443 = vpop.f32.mrf.mxu0
        %v444 = vadd.f32 %v287, %v443
        %445 = vmatmul.f32.gmra.mxu0 %v330
        %v446 = vpop.f32.mrf.mxu0
        %v447 = vadd.f32 %v287, %v446
        %448 = vmatmul.f32.gmra.mxu0 %v333
        %v449 = vpop.f32.mrf.mxu0
        %v450 = vadd.f32 %v287, %v449
        %451 = vmatmul.f32.gmra.mxu0 %v336
        %v452 = vpop.f32.mrf.mxu0
        %v453 = vadd.f32 %v287, %v452
        %454 = vmatmul.f32.gmra.mxu0 %v339
        %v455 = vpop.f32.mrf.mxu0
        %v456 = vadd.f32 %v287, %v455
        %457 = vmatmul.f32.gmra.mxu0 %v342
        %v458 = vpop.f32.mrf.mxu0
        %v459 = vadd.f32 %v287, %v458
        %460 = vmatmul.f32.gmra.mxu0 %v345
        %v461 = vpop.f32.mrf.mxu0
        %v462 = vadd.f32 %v287, %v461
        %463 = vmatmul.f32.gmra.mxu0 %v348
        %v464 = vpop.f32.mrf.mxu0
        %v465 = vadd.f32 %v287, %v464
        %466 = vmatmul.f32.gmra.mxu0 %v351
        %v467 = vpop.f32.mrf.mxu0
        %v468 = vadd.f32 %v287, %v467
        %469 = vmatmul.f32.gmra.mxu0 %v354
        %v470 = vpop.f32.mrf.mxu0
        %v471 = vadd.f32 %v287, %v470
        %472 = vmatmul.f32.gmra.mxu0 %v357
        %v473 = vpop.f32.mrf.mxu0
        %v474 = vadd.f32 %v287, %v473
        %475 = vmatmul.f32.gmra.mxu0 %v360
        %v476 = vpop.f32.mrf.mxu0
        %v477 = vadd.f32 %v287, %v476
        %478 = vmatmul.f32.gmra.mxu0 %v363
        %v479 = vpop.f32.mrf.mxu0
        %v480 = vadd.f32 %v287, %v479
        %481 = vmatmul.f32.gmra.mxu0 %v366
        %v482 = vpop.f32.mrf.mxu0
        %v483 = vadd.f32 %v287, %v482
        %484 = vmatmul.f32.gmra.mxu0 %v369
        %v485 = vpop.f32.mrf.mxu0
        %v486 = vadd.f32 %v287, %v485
        %487 = vmatmul.f32.gmra.mxu0 %v372
        %v488 = vpop.f32.mrf.mxu0
        %v489 = vadd.f32 %v287, %v488
        %490 = vmatmul.f32.gmra.mxu0 %v375
        %v491 = vpop.f32.mrf.mxu0
        %v492 = vadd.f32 %v287, %v491
        %493 = vmatmul.f32.gmra.mxu0 %v378
        %v494 = vpop.f32.mrf.mxu0
        %v495 = vadd.f32 %v287, %v494
        %496 = vmatmul.f32.gmra.mxu0 %v381
        %v497 = vpop.f32.mrf.mxu0
        %v498 = vadd.f32 %v287, %v497
        %499 = vmatmul.f32.gmra.mxu0 %v384
        %v500 = vpop.f32.mrf.mxu0
        %v501 = vadd.f32 %v287, %v500
        %502 = vdwg.mxu0
        %v503 = vmax.f32 %v408, 0.0
        %v504 = vmax.f32 %v411, 0.0
        %v505 = vmax.f32 %v414, 0.0
        %v506 = vmax.f32 %v417, 0.0
        %v507 = vmax.f32 %v420, 0.0
        %v508 = vmax.f32 %v423, 0.0
        %v509 = vmax.f32 %v426, 0.0
        %v510 = vmax.f32 %v429, 0.0
        %v511 = vmax.f32 %v432, 0.0
        %v512 = vmax.f32 %v435, 0.0
        %v513 = vmax.f32 %v438, 0.0
        %v514 = vmax.f32 %v441, 0.0
        %v515 = vmax.f32 %v444, 0.0
        %v516 = vmax.f32 %v447, 0.0
        %v517 = vmax.f32 %v450, 0.0
        %v518 = vmax.f32 %v453, 0.0
        %v519 = vmax.f32 %v456, 0.0
        %v520 = vmax.f32 %v459, 0.0
        %v521 = vmax.f32 %v462, 0.0
        %v522 = vmax.f32 %v465, 0.0
        %v523 = vmax.f32 %v468, 0.0
        %v524 = vmax.f32 %v471, 0.0
        %v525 = vmax.f32 %v474, 0.0
        %v526 = vmax.f32 %v477, 0.0
        %v527 = vmax.f32 %v480, 0.0
        %v528 = vmax.f32 %v483, 0.0
        %v529 = vmax.f32 %v486, 0.0
        %v530 = vmax.f32 %v489, 0.0
        %v531 = vmax.f32 %v492, 0.0
        %v532 = vmax.f32 %v495, 0.0
        %v533 = vmax.f32 %v498, 0.0
        %v534 = vmax.f32 %v501, 0.0
        %vm535 = vcmask 261120
        %v536 = vsel %vm535, %v503, 0.0
        %v537 = vsel %vm535, %v504, 0.0
        %v538 = vadd.f32 %v536, %v537
        %v539 = vsel %vm535, %v505, 0.0
        %v540 = vadd.f32 %v538, %v539
        %v541 = vsel %vm535, %v506, 0.0
        %v542 = vadd.f32 %v540, %v541
        %v543 = vsel %vm535, %v507, 0.0
        %v544 = vadd.f32 %v542, %v543
        %v545 = vsel %vm535, %v508, 0.0
        %v546 = vadd.f32 %v544, %v545
        %v547 = vsel %vm535, %v509, 0.0
        %v548 = vadd.f32 %v546, %v547
        %v549 = vsel %vm535, %v510, 0.0
        %v550 = vadd.f32 %v548, %v549
        %v551 = vsel %vm535, %v511, 0.0
        %v552 = vadd.f32 %v550, %v551
        %v553 = vsel %vm535, %v512, 0.0
        %v554 = vadd.f32 %v552, %v553
        %v555 = vsel %vm535, %v513, 0.0
        %v556 = vadd.f32 %v554, %v555
        %v557 = vsel %vm535, %v514, 0.0
        %v558 = vadd.f32 %v556, %v557
        %v559 = vsel %vm535, %v515, 0.0
        %v560 = vadd.f32 %v558, %v559
        %v561 = vsel %vm535, %v516, 0.0
        %v562 = vadd.f32 %v560, %v561
        %v563 = vsel %vm535, %v517, 0.0
        %v564 = vadd.f32 %v562, %v563
        %v565 = vsel %vm535, %v518, 0.0
        %v566 = vadd.f32 %v564, %v565
        %v567 = vsel %vm535, %v519, 0.0
        %v568 = vadd.f32 %v566, %v567
        %v569 = vsel %vm535, %v520, 0.0
        %v570 = vadd.f32 %v568, %v569
        %v571 = vsel %vm535, %v521, 0.0
        %v572 = vadd.f32 %v570, %v571
        %v573 = vsel %vm535, %v522, 0.0
        %v574 = vadd.f32 %v572, %v573
        %v575 = vsel %vm535, %v523, 0.0
        %v576 = vadd.f32 %v574, %v575
        %v577 = vsel %vm535, %v524, 0.0
        %v578 = vadd.f32 %v576, %v577
        %v579 = vsel %vm535, %v525, 0.0
        %v580 = vadd.f32 %v578, %v579
        %v581 = vsel %vm535, %v526, 0.0
        %v582 = vadd.f32 %v580, %v581
        %v583 = vsel %vm535, %v527, 0.0
        %v584 = vadd.f32 %v582, %v583
        %v585 = vsel %vm535, %v528, 0.0
        %v586 = vadd.f32 %v584, %v585
        %v587 = vsel %vm535, %v529, 0.0
        %v588 = vadd.f32 %v586, %v587
        %v589 = vsel %vm535, %v530, 0.0
        %v590 = vadd.f32 %v588, %v589
        %v591 = vsel %vm535, %v531, 0.0
        %v592 = vadd.f32 %v590, %v591
        %v593 = vsel %vm535, %v532, 0.0
        %v594 = vadd.f32 %v592, %v593
        %v595 = vsel %vm535, %v533, 0.0
        %v596 = vadd.f32 %v594, %v595
        %v597 = vsel %vm535, %v534, 0.0
        %v598 = vadd.f32 %v596, %v597
        %v599 = vrot.slane %v598, 4
        %v600 = vadd.f32 %v598, %v599
        %v601 = vrot.slane %v600, 2
        %v602 = vadd.f32 %v600, %v601
        %v603 = vrot.slane %v602, 1
        %v604 = vadd.f32 %v602, %v603
        %v605 = vrcp.pop 256.0
        %v606 = vmul.f32 256.0, %v605
        %v607 = vsub.f32 1.0, %v606
        %v608 = vmul.f32 %v605, %v607
        %v609 = vadd.f32 %v605, %v608
        %vm610 = vweird.f32 %v605
        %v611 = vsel %vm610, %v605, %v609
        %v612 = vmul.f32 %v604, %v611
        %v613 = vld [vmem:[%s3] sm:$0xff]
        %v614 = vld [vmem:[%s3 + $0x8] sm:$0xff]
        %v615 = vld [vmem:[%s3 + $0x10] sm:$0xff]
        %v616 = vld [vmem:[%s3 + $0x18] sm:$0xff]
        %v618 = vsel %vm535, %v612, 0
        %620 = vmatpush.msra.mxu0 0.0
        %621 = vmatpush.msra.mxu0 0.0
        %622 = vmatpush.msra.mxu0 0.0
        %623 = vmatpush.msra.mxu0 0.0
        %624 = vmatpush.msra.mxu0 0.0
        %625 = vmatpush.msra.mxu0 0.0
        %626 = vmatpush.msra.mxu0 0.0
        %627 = vmatpush.msra.mxu0 0.0
        %628 = vmatpush.msra.mxu0 0.0
        %629 = vmatpush.msra.mxu0 0.0
        %630 = vmatpush.msra.mxu0 0.0
        %631 = vmatpush.msra.mxu0 0.0
        %632 = vmatpush.msra.mxu0 %v616
        %633 = vmatpush.msra.mxu0 %v615
        %634 = vmatpush.msra.mxu0 %v614
        %635 = vmatpush.msra.mxu0 %v613
        %636 = vmatmul.f32.gmra.mxu0 %v618
        %v637 = vpop.f32.mrf.mxu0
        %v638 = vadd.f32 0.0, %v637
        %639 = vdwg.mxu0
        %v640 = vld [vmem:[%s4] sm:$0xff]
        %v641 = vld [vmem:[%s4 + $0x8] sm:$0xff]
        %v642 = vld [vmem:[%s4 + $0x10] sm:$0xff]
        %v643 = vld [vmem:[%s4 + $0x18] sm:$0xff]
        %v644 = vld [vmem:[%s4 + $0x20] sm:$0xff]
        %v645 = vld [vmem:[%s4 + $0x28] sm:$0xff]
        %v646 = vld [vmem:[%s4 + $0x30] sm:$0xff]
        %v647 = vld [vmem:[%s4 + $0x38] sm:$0xff]
        %v648 = vld [vmem:[%s5] sm:$0x1]
        %vm649 = vcmask 523264
        %v651 = vsel %vm649, %v638, 0
        %653 = vmatpush.msra.mxu0 0.0
        %654 = vmatpush.msra.mxu0 0.0
        %655 = vmatpush.msra.mxu0 0.0
        %656 = vmatpush.msra.mxu0 0.0
        %657 = vmatpush.msra.mxu0 0.0
        %658 = vmatpush.msra.mxu0 0.0
        %659 = vmatpush.msra.mxu0 0.0
        %660 = vmatpush.msra.mxu0 0.0
        %661 = vmatpush.msra.mxu0 %v647
        %662 = vmatpush.msra.mxu0 %v646
        %663 = vmatpush.msra.mxu0 %v645
        %664 = vmatpush.msra.mxu0 %v644
        %665 = vmatpush.msra.mxu0 %v643
        %666 = vmatpush.msra.mxu0 %v642
        %667 = vmatpush.msra.mxu0 %v641
        %668 = vmatpush.msra.mxu0 %v640
        %669 = vmatmul.f32.gmra.mxu0 %v651
        %v670 = vpop.f32.mrf.mxu0
        %v671 = vadd.f32 %v648, %v670
        %672 = vdwg.mxu0
        %673 = vst [vmem:[%s243] sm:$0x1] %v671
        %s674 = sand.u32 %s159, 1
        %s675 = scalar_lea.sflag [#allocation3], %s674
        %s676 = sand.u32 %s159, 1
        %s677 = scalar_lea.vmem [#allocation2], %s676
        // Predicated region
        $region45: #{tpu_custom_call.1} parent=43 // pred_check
          %p678 = pneg %p169
        $region46: #{tpu_custom_call.1} parent=43 // pred_check_branch
          %680 = sbr.rel (%p678) target = $region48
        $region47: #{tpu_custom_call.1} parent=43 // pred_region
          %682 = vsyncadd %s675, 0
          %s683 = scalar_lea.hbm %s6, %s20
          %s685 = sshll.u32 %s677, 4
          %s686 = int_to_ptr.vmem [resolvable:$true] %s685
          %s687 = sshll.u32 %s683, 4
          %s688 = int_to_ptr.hbm [resolvable:$true] %s687
          %690 = dma.vmem_to_hbm [thread:$0]  %s686, 16, %s688, %s675
        $region48: #{tpu_custom_call.1} parent=43 // pred_fallthru
          _
      $region44: #{tpu_custom_call.1} parent=5 // pred_fallthru
        _
      %p691 = scmp.le.s32.totalorder 2, %s15
      // Predicated region
      $region49: #{tpu_custom_call.1} parent=5 // pred_check
        %p692 = pneg %p691
      $region50: #{tpu_custom_call.1} parent=5 // pred_check_branch
        %694 = sbr.rel (%p692) target = $region52
      $region51: #{tpu_custom_call.1} parent=5 // pred_region
        %s695 = ssub.s32 %s15, 2
        // Predicated region
        $region53: #{tpu_custom_call.1} parent=51 // pred_check
          %p696 = pneg %p175
        $region54: #{tpu_custom_call.1} parent=51 // pred_check_branch
          %698 = sbr.rel (%p696) target = $region56
        $region55: #{tpu_custom_call.1} parent=51 // pred_region
          %s699 = sand.u32 %s160, 1
          %s700 = scalar_lea.sflag [#allocation3], %s699
          %s701 = sand.u32 %s160, 1
          %s702 = scalar_lea.vmem [#allocation2], %s701
          %704 = dma.done %s700, 16
        $region56: #{tpu_custom_call.1} parent=51 // pred_fallthru
          _
      $region52: #{tpu_custom_call.1} parent=5 // pred_fallthru
        _
    $region6: #{tpu_custom_call.1} parent=1 // loop_footer
      %s19 = sadd.s32 1, %s15
    $region7: #{tpu_custom_call.1} parent=1 // loop_footer_branch
      %14 = sbr.rel target = $region3
    $region8: #{tpu_custom_call.1} parent=1 // loop_exit
      _
    %705 = vsyncpa [#allocation3], 1
    %s706 = scalar_lea.sflag [#allocation3], 1
    %707 = vsyncpa %s706, 1

</llo_original>
